<compile_context>
chip_gen: v7x
topology: tpu7x:2x2x1
jax: 0.10.0
libtpu: 0.0.40
codegen_flags: <defaults>
</compile_context>

<pallas_src>
import math
import jax
import jax.numpy as jnp
from jax import lax
from jax.experimental import pallas as pl
from jax.experimental.pallas import tpu as pltpu


def _discriminator_kernel(v_ref, f_ref, o_ref):
    # v_ref: (1, H), f_ref: (tm, H), o_ref: (1, tm)
    # Contract over H on both operands (v @ f.T) -> lane-dense (1, tm) result.
    o_ref[...] = lax.dot_general(
        v_ref[...], f_ref[...],
        dimension_numbers=(((1,), (1,)), ((), ())),
        preferred_element_type=jnp.float32,
    ).astype(o_ref.dtype)


def discriminator_forward(features, weight, summary, *, tm=512):
    """features: (N, H), weight: (H, H), summary: (H,) -> (N,)."""
    N, H = features.shape
    assert weight.shape == (H, H)
    assert summary.shape == (H,)

    # Hoisted tiny matvec: W @ summary, done once outside the kernel.
    v_row = jnp.dot(weight, summary,
                    preferred_element_type=jnp.float32).reshape(1, H)
    v_row = v_row.astype(features.dtype)

    if N <= tm:
        # Single full-array block: no padding, no per-step pipeline overhead.
        tm_eff = N
        n_pad = N
    else:
        # tm multiple of 128 -> lane-dense output blocks; pad rows to a
        # multiple of tm and slice the result back afterwards.
        tm_eff = tm
        n_pad = ((N + tm_eff - 1) // tm_eff) * tm_eff

    feats = features
    if n_pad != N:
        feats = jnp.pad(features, ((0, n_pad - N), (0, 0)))

    grid = (n_pad // tm_eff,)

    # VMEM note: features tile is double-buffered -> 2 * tm_eff * H * 4 bytes.
    # tm=512 keeps this well under the 32 MiB scoped default up to H ~ 4096.
    # TODO(synk): for very large H add a K-reduction grid axis with a (tm,1)
    # f32 accumulator instead of loading the full H per tile.
    out = pl.pallas_call(
        _discriminator_kernel,
        out_shape=jax.ShapeDtypeStruct((1, n_pad), features.dtype),
        grid_spec=pltpu.PrefetchScalarGridSpec(
            num_scalar_prefetch=0,
            grid=grid,
            in_specs=[
                pl.BlockSpec((1, H), lambda i: (0, 0)),       # precomputed v
                pl.BlockSpec((tm_eff, H), lambda i: (i, 0)),  # feature row tile
            ],
            out_specs=pl.BlockSpec((1, tm_eff), lambda i: (0, i)),
        ),
        compiler_params=pltpu.CompilerParams(
            dimension_semantics=("parallel",)),
    )(v_row, feats)

    return out.reshape(n_pad)[:N]


if __name__ == "__main__":
    # Small, deterministic example consistent with the module:
    #   n_hidden = 32, N (number of nodes) = 16
    n_hidden = 32
    N = 16

    key = jax.random.PRNGKey(0)
    k_w, k_f, k_s = jax.random.split(key, 3)

    # Parameter init mirrors Discriminator.reset_parameters:
    #   uniform(-1/sqrt(n_hidden), 1/sqrt(n_hidden)) on an (H, H) weight.
    bound = 1.0 / math.sqrt(n_hidden)
    weight = jax.random.uniform(k_w, (n_hidden, n_hidden),
                                minval=-bound, maxval=bound,
                                dtype=jnp.float32)

    features = jax.random.normal(k_f, (N, n_hidden), dtype=jnp.float32)
    summary = jax.random.normal(k_s, (n_hidden,), dtype=jnp.float32)

    out = discriminator_forward(features, weight, summary)
    out = jax.block_until_ready(out)

    # Reference check against plain JAX (same semantics as torch.matmul chain).
    ref = features @ (weight @ summary)
    assert out.shape == (N,)
    assert jnp.allclose(out, ref, atol=1e-5, rtol=1e-5), "mismatch vs reference"

    # Also exercise the tiled (padded, multi-step) path on a larger shape so
    # the grid/padding logic is covered.
    N2 = 1500  # not a multiple of tm -> exercises padding; grid has >=2 steps
    features2 = jax.random.normal(jax.random.PRNGKey(1), (N2, n_hidden),
                                  dtype=jnp.float32)
    out2 = jax.block_until_ready(
        discriminator_forward(features2, weight, summary))
    ref2 = features2 @ (weight @ summary)
    assert out2.shape == (N2,)
    assert jnp.allclose(out2, ref2, atol=1e-4, rtol=1e-4), "mismatch (tiled)"

    print("KERNEL_OK")
</pallas_src>

<mosaic_0001>
module attributes {stable_mosaic.version = 11 : i64} {
  func.func @_discriminator_kernel(%arg0: i32, %arg1: memref<1x32xf32, #tpu.memory_space<vmem>>, %arg2: memref<16x32xf32, #tpu.memory_space<vmem>>, %arg3: memref<1x16xf32, #tpu.memory_space<vmem>>) attributes {dimension_semantics = [#tpu.dimension_semantics<parallel>], iteration_bounds = array<i64: 1>, scalar_prefetch = 0 : i64, scratch_operands = 0 : i64, tpu.core_type = #tpu.core_type<tc>, window_params = [{pipeline_mode = #tpu.pipeline_mode<synchronous>, transform_indices = @transform_0, window_bounds = array<i64: 1, 32>}, {transform_indices = @transform_1, window_bounds = array<i64: 16, 32>}, {transform_indices = @transform_2, window_bounds = array<i64: 1, 16>}]} {
    %c0 = arith.constant 0 : index
    %c0_0 = arith.constant 0 : index
    %0 = vector.load %arg1[%c0, %c0_0] : memref<1x32xf32, #tpu.memory_space<vmem>>, vector<1x32xf32>
    %c0_1 = arith.constant 0 : index
    %c0_2 = arith.constant 0 : index
    %1 = vector.load %arg2[%c0_1, %c0_2] : memref<16x32xf32, #tpu.memory_space<vmem>>, vector<16x32xf32>
    %cst = arith.constant dense<0.000000e+00> : vector<1x16xf32>
    %2 = tpu.matmul %0, %1, %cst {dimension_numbers = #tpu.dot_dimension_numbers<[1], [1], [0], [0], [0, 0, 1, 0], [], []>} : vector<1x32xf32>, vector<16x32xf32>, vector<1x16xf32> -> vector<1x16xf32>
    %c0_3 = arith.constant 0 : index
    %c0_4 = arith.constant 0 : index
    %3 = vector.load %arg3[%c0_3, %c0_4] : memref<1x16xf32, #tpu.memory_space<vmem>>, vector<1x16xf32>
    tpu.vector_store %arg3[%c0_3, %c0_4], %2 {strides = array<i32>} : memref<1x16xf32, #tpu.memory_space<vmem>>, vector<1x16xf32>,
    return
  }
  func.func @transform_0(%arg0: i32) -> (i32, i32) {
    %c0_i32 = arith.constant 0 : i32
    %c0_i32_0 = arith.constant 0 : i32
    %c0_i32_1 = arith.constant 0 : i32
    return %c0_i32, %c0_i32_0 : i32, i32
  }
  func.func @transform_1(%arg0: i32) -> (i32, i32) {
    %c0_i32 = arith.constant 0 : i32
    %c0_i32_0 = arith.constant 0 : i32
    return %arg0, %c0_i32 : i32, i32
  }
  func.func @transform_2(%arg0: i32) -> (i32, i32) {
    %c0_i32 = arith.constant 0 : i32
    %c0_i32_0 = arith.constant 0 : i32
    return %c0_i32, %arg0 : i32, i32
  }
}

</mosaic_0001>

<llo_original>
// kernel: tpu_custom_call.1
$region0: #{tpu_custom_call.1}
  #allocation0 [shape = 'u32[]', space=smem, size = 0x4, offset = 0x4, fixed_abs, tag = 'smem constant byte address 0x4 - core index']
  #allocation1 [shape = 'u32[144,128]{1,0:T(1,128)}', space=vmem, size = 0x12000, scoped, tag = 'internal scratch']
  %s0 = inlined_call_operand.hbm [shape: f32[1,32], index: 0, kind: input, shape index: {}]
  %s1 = inlined_call_operand.hbm [shape: f32[16,32], index: 1, kind: input, shape index: {}]
  %s2 = inlined_call_operand.hbm [shape: f32[1,16], index: 2, kind: output, shape index: {}]
  %s3 = sld [smem:[#allocation0]]
  $region26: #{tpu_custom_call.1} parent=0
    _
  %s5 = ssub.s32 1, %s3
  %s6 = scalar_select 0, %s5, %s3
  $region1: #{tpu_custom_call.1} parent=0
    #allocation2 [shape = 'u8[512]{0}', space=vmem, size = 0x400, scoped, tag = 'input window, operand 0, single buffered']
    #allocation3 [shape = 's32[1]{0}', space=sflag, size = 0x4, scoped, tag = 'scoped memory for tpu_custom_call.1']
    #allocation4 [shape = 's32[1]{0}', space=sflag, size = 0x4, scoped, tag = 'scoped memory for tpu_custom_call.1']
    #allocation5 [shape = 'u8[8192]{0}', space=vmem, size = 0x2000, scoped, tag = 'input window, operand 1, single buffered']
    #allocation6 [shape = 's32[1]{0}', space=sflag, size = 0x4, scoped, tag = 'scoped memory for tpu_custom_call.1']
    #allocation7 [shape = 'u8[512]{0}', space=vmem, size = 0x400, scoped, tag = 'output window, operand 0, single buffered']
    %7 = vsyncpa [#allocation3], 0
    %8 = vsyncpa [#allocation6], 0
    %9 = vsyncpa [#allocation4], 0
    // Predicated region
    $region2: #{tpu_custom_call.1} parent=1 // pred_check
      _
    $region3: #{tpu_custom_call.1} parent=1 // pred_check_branch
      %11 = sbr.rel (0) target = $region5
    $region4: #{tpu_custom_call.1} parent=1 // pred_region
      %s13 = ssub.s32 16, 16
      %14 = vsyncadd [#allocation3], %s13
      %s16 = sshll.u32 [#allocation2], 4
      %s17 = int_to_ptr.vmem [resolvable:$true] %s16
      %19 = dma.hbm_to_vmem [thread:$0]  %s0, 16, %s17, [#allocation3]
    $region5: #{tpu_custom_call.1} parent=1 // pred_fallthru
      _
    // Predicated region
    $region6: #{tpu_custom_call.1} parent=1 // pred_check
      _
    $region7: #{tpu_custom_call.1} parent=1 // pred_check_branch
      %21 = sbr.rel (0) target = $region9
    $region8: #{tpu_custom_call.1} parent=1 // pred_region
      %s23 = ssub.s32 256, 256
      %24 = vsyncadd [#allocation6], %s23
      %s25 = sshll.u32 [#allocation5], 4
      %s26 = int_to_ptr.vmem [resolvable:$true] %s25
      %31 = dma.hbm_to_vmem [thread:$0]  %s1, 256, %s26, [#allocation6], 128, 128, 8
    $region9: #{tpu_custom_call.1} parent=1 // pred_fallthru
      _
    // Predicated region
    $region10: #{tpu_custom_call.1} parent=1 // pred_check
      _
    $region11: #{tpu_custom_call.1} parent=1 // pred_check_branch
      %33 = sbr.rel (0) target = $region13
    $region12: #{tpu_custom_call.1} parent=1 // pred_region
      %34 = dma.done [#allocation3], 16
    $region13: #{tpu_custom_call.1} parent=1 // pred_fallthru
      _
    // Predicated region
    $region14: #{tpu_custom_call.1} parent=1 // pred_check
      _
    $region15: #{tpu_custom_call.1} parent=1 // pred_check_branch
      %36 = sbr.rel (0) target = $region17
    $region16: #{tpu_custom_call.1} parent=1 // pred_region
      %37 = dma.done [#allocation6], 256
    $region17: #{tpu_custom_call.1} parent=1 // pred_fallthru
      _
    %v38 = vld [vmem:[#allocation2] sm:$0x1]
    %v39 = vld [vmem:[#allocation5] sm:$0xff]
    %v40 = vld [vmem:[#allocation5 + $0x8] sm:$0xff]
    %vm41 = vcmask 261120
    %v43 = vsel %vm41, %v38, 0
    %v46 = vsel %vm41, %v39, 0
    %v49 = vsel %vm41, %v40, 0
    %51 = vmatprep.subr.mxu0 0.0
    %52 = vmatpush1.xpose.msra.mxu0 %v46
    %53 = vmatprep.subr.mxu0 0.0
    %54 = vmatpush1.xpose.msra.mxu0 %v49
    %55 = vmatprep.subr.mxu0 0.0
    %56 = vmatpush1.xpose.msra.mxu0 0.0
    %57 = vmatprep.subr.mxu0 0.0
    %58 = vmatpush1.xpose.msra.mxu0 0.0
    %59 = vmatprep.subr.mxu0 0.0
    %60 = vmatpush1.xpose.msra.mxu0 0.0
    %61 = vmatprep.subr.mxu0 0.0
    %62 = vmatpush1.xpose.msra.mxu0 0.0
    %63 = vmatprep.subr.mxu0 0.0
    %64 = vmatpush1.xpose.msra.mxu0 0.0
    %65 = vmatprep.subr.mxu0 0.0
    %66 = vmatpush1.xpose.msra.mxu0 0.0
    %67 = vmatprep.subr.mxu0 0.0
    %68 = vmatpush1.xpose.msra.mxu0 0.0
    %69 = vmatprep.subr.mxu0 0.0
    %70 = vmatpush1.xpose.msra.mxu0 0.0
    %71 = vmatprep.subr.mxu0 0.0
    %72 = vmatpush1.xpose.msra.mxu0 0.0
    %73 = vmatprep.subr.mxu0 0.0
    %74 = vmatpush1.xpose.msra.mxu0 0.0
    %75 = vmatprep.subr.mxu0 0.0
    %76 = vmatpush1.xpose.msra.mxu0 0.0
    %77 = vmatprep.subr.mxu0 0.0
    %78 = vmatpush1.xpose.msra.mxu0 0.0
    %79 = vmatprep.subr.mxu0 0.0
    %80 = vmatpush1.xpose.msra.mxu0 0.0
    %81 = vmatprep.subr.mxu0 0.0
    %82 = vmatpush1.xpose.msra.mxu0 0.0
    %83 = vmatprep.subr.mxu0 0.0
    %84 = vmatpush1.xpose.msra.mxu0 0.0
    %85 = vmatprep.subr.mxu0 0.0
    %86 = vmatpush1.xpose.msra.mxu0 0.0
    %87 = vmatprep.subr.mxu0 0.0
    %88 = vmatpush1.xpose.msra.mxu0 0.0
    %89 = vmatprep.subr.mxu0 0.0
    %90 = vmatpush1.xpose.msra.mxu0 0.0
    %91 = vmatprep.subr.mxu0 0.0
    %92 = vmatpush1.xpose.msra.mxu0 0.0
    %93 = vmatprep.subr.mxu0 0.0
    %94 = vmatpush1.xpose.msra.mxu0 0.0
    %95 = vmatprep.subr.mxu0 0.0
    %96 = vmatpush1.xpose.msra.mxu0 0.0
    %97 = vmatprep.subr.mxu0 0.0
    %98 = vmatpush1.xpose.msra.mxu0 0.0
    %99 = vmatprep.subr.mxu0 0.0
    %100 = vmatpush1.xpose.msra.mxu0 0.0
    %101 = vmatprep.subr.mxu0 0.0
    %102 = vmatpush1.xpose.msra.mxu0 0.0
    %103 = vmatprep.subr.mxu0 0.0
    %104 = vmatpush1.xpose.msra.mxu0 0.0
    %105 = vmatprep.subr.mxu0 0.0
    %106 = vmatpush1.xpose.msra.mxu0 0.0
    %107 = vmatprep.subr.mxu0 0.0
    %108 = vmatpush1.xpose.msra.mxu0 0.0
    %109 = vmatprep.subr.mxu0 0.0
    %110 = vmatpush1.xpose.msra.mxu0 0.0
    %111 = vmatprep.subr.mxu0 0.0
    %112 = vmatpush1.xpose.msra.mxu0 0.0
    %113 = vmatprep.subr.mxu0 0.0
    %114 = vmatpush1.xpose.msra.mxu0 0.0
    %115 = vmatprep.mubr.f32.mxu0 0.0
    %116 = vmatmul.mubr.f32.gmra.mrb[0].mxu0 %v43
    %v117 = vpop.f32.mrb[0].mxu0
    %v118 = vadd.f32 0.0, %v117
    %v119 = vpop.f32.mrb[0].mxu0
    %120 = vdwg.mxu0
    %vm121 = vcmask 122880
    %122 = vst.msk [vmem:[#allocation7] sm:$0x1] %vm121, %v118
    // Predicated region
    $region18: #{tpu_custom_call.1} parent=1 // pred_check
      _
    $region19: #{tpu_custom_call.1} parent=1 // pred_check_branch
      %124 = sbr.rel (0) target = $region21
    $region20: #{tpu_custom_call.1} parent=1 // pred_region
      %s126 = ssub.s32 16, 16
      %127 = vsyncadd [#allocation4], %s126
      %s129 = sshll.u32 [#allocation7], 4
      %s130 = int_to_ptr.vmem [resolvable:$true] %s129
      %132 = dma.vmem_to_hbm [thread:$0]  %s130, 16, %s2, [#allocation4]
    $region21: #{tpu_custom_call.1} parent=1 // pred_fallthru
      _
    // Predicated region
    $region22: #{tpu_custom_call.1} parent=1 // pred_check
      _
    $region23: #{tpu_custom_call.1} parent=1 // pred_check_branch
      %134 = sbr.rel (0) target = $region25
    $region24: #{tpu_custom_call.1} parent=1 // pred_region
      %135 = dma.done [#allocation4], 16
    $region25: #{tpu_custom_call.1} parent=1 // pred_fallthru
      _
    %136 = vsyncpa [#allocation3], 1
    %137 = vsyncpa [#allocation6], 1
    %138 = vsyncpa [#allocation4], 1

</llo_original>
